<compile_context>
chip_gen: v7x
topology: tpu7x:2x2x1
jax: 0.10.0
libtpu: 0.0.40
codegen_flags: <defaults>
</compile_context>

<pallas_src>
import functools

import jax
import jax.numpy as jnp
from jax.experimental import pallas as pl
from jax.experimental.pallas import tpu as pltpu


def encoder_kernel(obs_ref,
                   w1_ref, b1_ref,
                   w2_ref, b2_ref,
                   wh_ref, bh_ref,
                   mean_ref, var_ref,
                   *, pad_lod):
    cdt = w1_ref.dtype  # compute dtype for MXU operands (f32 or bf16)
    x = obs_ref[...]

    # hidden MLP: two MXU matmuls (f32 accumulate) + VPU relu
    h = jnp.dot(x, w1_ref[...], preferred_element_type=jnp.float32) + b1_ref[...]
    h = jnp.maximum(h, 0.0).astype(cdt)
    h = jnp.dot(h, w2_ref[...], preferred_element_type=jnp.float32) + b2_ref[...]
    h = jnp.maximum(h, 0.0).astype(cdt)

    # fused heads: one matmul produces [ mean (pad_lod) | log_var (pad_lod) ]
    head = jnp.dot(h, wh_ref[...], preferred_element_type=jnp.float32) + bh_ref[...]
    mean = head[:, :pad_lod]        # padded columns are exactly zero
    log_var = head[:, pad_lod:]

    # post L2 normalization (torch: x / max(||x||_2, eps), eps=1e-8);
    # zero-padded columns contribute nothing to the norm.
    sq = jnp.sum(mean * mean, axis=-1, keepdims=True)
    inv = pl.reciprocal(jnp.maximum(jnp.sqrt(sq), 1e-8), approx=False)  # EUP, not VALU divide
    mean_ref[...] = mean * inv

    # 'elup1' variance activation: exp(x) where x < 0, else x + 1
    var_ref[...] = jnp.where(log_var < 0.0, jnp.exp(log_var), log_var + 1.0)


def _round_up(x, m):
    return (x + m - 1) // m * m


def encoder_forward(obs, params, *, tile_b=128, compute_dtype=jnp.float32):
    """obs: (..., D_in) float. params: dict of weights/biases. Returns (mean, var) of (..., lod)."""
    lead = obs.shape[:-1]
    d_in = obs.shape[-1]
    obs2 = obs.reshape(-1, d_in).astype(jnp.float32)   # fold leading dims into batch
    b = obs2.shape[0]

    hdim = params["w1"].shape[1]
    lod = params["wm"].shape[1]
    pad_lod = _round_up(lod, 128)                      # lane-dense output width

    # fused, zero-padded head weights: cols [0,lod) -> mean, cols [pad,pad+lod) -> log_var
    wh = jnp.zeros((hdim, 2 * pad_lod), jnp.float32)
    wh = wh.at[:, :lod].set(params["wm"])
    wh = wh.at[:, pad_lod:pad_lod + lod].set(params["wv"])
    bh = jnp.zeros((1, 2 * pad_lod), jnp.float32)
    bh = bh.at[:, :lod].set(params["bm"].reshape(1, -1))
    bh = bh.at[:, pad_lod:pad_lod + lod].set(params["bv"].reshape(1, -1))

    # batch tiling: pad batch so grid divides exactly (sublane granularity 8)
    tile = min(_round_up(b, 8), _round_up(tile_b, 8))
    b_pad = _round_up(b, tile)
    if b_pad != b:
        obs2 = jnp.pad(obs2, ((0, b_pad - b), (0, 0)))
    grid = (b_pad // tile,)

    # MXU operands in compute_dtype (bf16 recommended at large shapes); biases stay f32
    obs_c = obs2.astype(compute_dtype)
    w1 = params["w1"].astype(compute_dtype)
    w2 = params["w2"].astype(compute_dtype)
    whc = wh.astype(compute_dtype)
    b1 = params["b1"].reshape(1, -1).astype(jnp.float32)
    b2 = params["b2"].reshape(1, -1).astype(jnp.float32)

    rep = lambda i: (0, 0)   # replicated (resident) weights/biases
    in_specs = [
        pl.BlockSpec((tile, d_in), lambda i: (i, 0)),                   # obs (batch-tiled)
        pl.BlockSpec((d_in, hdim), rep), pl.BlockSpec((1, hdim), rep),  # layer 1
        pl.BlockSpec((hdim, hdim), rep), pl.BlockSpec((1, hdim), rep),  # layer 2
        pl.BlockSpec((hdim, 2 * pad_lod), rep),                         # fused heads
        pl.BlockSpec((1, 2 * pad_lod), rep),
    ]
    out_specs = [
        pl.BlockSpec((tile, pad_lod), lambda i: (i, 0)),   # mean (lane-dense, padded)
        pl.BlockSpec((tile, pad_lod), lambda i: (i, 0)),   # var  (lane-dense, padded)
    ]

    mean_p, var_p = pl.pallas_call(
        functools.partial(encoder_kernel, pad_lod=pad_lod),
        out_shape=(
            jax.ShapeDtypeStruct((b_pad, pad_lod), jnp.float32),
            jax.ShapeDtypeStruct((b_pad, pad_lod), jnp.float32),
        ),
        grid_spec=pltpu.PrefetchScalarGridSpec(
            num_scalar_prefetch=0,
            grid=grid,
            in_specs=in_specs,
            out_specs=out_specs,
        ),
        compiler_params=pltpu.CompilerParams(
            dimension_semantics=("parallel",),        # shards batch across TCs on v7x
            vmem_limit_bytes=48 * 1024 * 1024,        # safe ceiling on 64 MiB v7x VMEM
        ),
    )(obs_c, w1, b1, w2, b2, whc, bh)

    mean = mean_p[:b, :lod].reshape(*lead, lod)
    var = var_p[:b, :lod].reshape(*lead, lod)
    return mean, var


def reference_forward(obs, params):
    """Plain-JAX reference mirroring the PyTorch module semantics."""
    h = jnp.maximum(obs @ params["w1"] + params["b1"].reshape(-1), 0.0)
    h = jnp.maximum(h @ params["w2"] + params["b2"].reshape(-1), 0.0)
    mean = h @ params["wm"] + params["bm"].reshape(-1)
    norm = jnp.sqrt(jnp.sum(mean * mean, axis=-1, keepdims=True))
    mean = mean / jnp.maximum(norm, 1e-8)
    log_var = h @ params["wv"] + params["bv"].reshape(-1)
    var = jnp.where(log_var < 0.0, jnp.exp(log_var), log_var + 1.0)
    return mean, var


def init_params(key, d_in, hidden, lod):
    ks = jax.random.split(key, 8)

    def lin(kw, kb, fan_in, fan_out):
        bound = 1.0 / jnp.sqrt(fan_in)
        w = jax.random.uniform(kw, (fan_in, fan_out), jnp.float32, -bound, bound)
        b = jax.random.uniform(kb, (1, fan_out), jnp.float32, -bound, bound)
        return w, b

    w1, b1 = lin(ks[0], ks[1], d_in, hidden)
    w2, b2 = lin(ks[2], ks[3], hidden, hidden)
    wm, bm = lin(ks[4], ks[5], hidden, lod)
    wv, bv = lin(ks[6], ks[7], hidden, lod)
    return dict(w1=w1, b1=b1, w2=w2, b2=b2, wm=wm, bm=bm, wv=wv, bv=bv)


if __name__ == "__main__":
    key = jax.random.PRNGKey(0)
    k_obs, k_par = jax.random.split(key)

    # leading (T, B) dims get folded into one batch axis of 256 -> 2 grid steps of 128
    T, B, D_IN, H, LOD = 4, 64, 32, 32, 8
    obs = jax.random.normal(k_obs, (T, B, D_IN), jnp.float32)
    params = init_params(k_par, D_IN, H, LOD)

    mean_ref, var_ref = reference_forward(obs, params)

    # f32-operand path (tight tolerance)
    mean, var = encoder_forward(obs, params, tile_b=128, compute_dtype=jnp.float32)
    jax.block_until_ready((mean, var))
    assert mean.shape == (T, B, LOD) and var.shape == (T, B, LOD)
    assert jnp.allclose(mean, mean_ref, atol=1e-4, rtol=1e-4)
    assert jnp.allclose(var, var_ref, atol=1e-4, rtol=1e-4)
    assert bool(jnp.all(var >= 0.0))

    # bf16-operand path (MXU-native rate, f32 accumulate) -- looser tolerance
    mean_bf, var_bf = encoder_forward(obs, params, tile_b=128, compute_dtype=jnp.bfloat16)
    jax.block_until_ready((mean_bf, var_bf))
    assert jnp.allclose(mean_bf, mean_ref, atol=1e-1, rtol=1e-1)
    assert jnp.allclose(var_bf, var_ref, atol=1e-1, rtol=1e-1)
    assert bool(jnp.all(var_bf >= 0.0))

    print("KERNEL_OK")
</pallas_src>

<mosaic_0001>
module attributes {stable_mosaic.version = 11 : i64} {
  func.func @encoder_kernel(%arg0: i32, %arg1: memref<128x32xf32, #tpu.memory_space<vmem>>, %arg2: memref<32x32xf32, #tpu.memory_space<vmem>>, %arg3: memref<1x32xf32, #tpu.memory_space<vmem>>, %arg4: memref<32x32xf32, #tpu.memory_space<vmem>>, %arg5: memref<1x32xf32, #tpu.memory_space<vmem>>, %arg6: memref<32x256xf32, #tpu.memory_space<vmem>>, %arg7: memref<1x256xf32, #tpu.memory_space<vmem>>, %arg8: memref<128x128xf32, #tpu.memory_space<vmem>>, %arg9: memref<128x128xf32, #tpu.memory_space<vmem>>) attributes {dimension_semantics = [#tpu.dimension_semantics<parallel>], iteration_bounds = array<i64: 2>, scalar_prefetch = 0 : i64, scratch_operands = 0 : i64, tpu.core_type = #tpu.core_type<tc>, window_params = [{transform_indices = @transform_0, window_bounds = array<i64: 128, 32>}, {pipeline_mode = #tpu.pipeline_mode<synchronous>, transform_indices = @transform_1, window_bounds = array<i64: 32, 32>}, {pipeline_mode = #tpu.pipeline_mode<synchronous>, transform_indices = @transform_2, window_bounds = array<i64: 1, 32>}, {pipeline_mode = #tpu.pipeline_mode<synchronous>, transform_indices = @transform_3, window_bounds = array<i64: 32, 32>}, {pipeline_mode = #tpu.pipeline_mode<synchronous>, transform_indices = @transform_4, window_bounds = array<i64: 1, 32>}, {pipeline_mode = #tpu.pipeline_mode<synchronous>, transform_indices = @transform_5, window_bounds = array<i64: 32, 256>}, {pipeline_mode = #tpu.pipeline_mode<synchronous>, transform_indices = @transform_6, window_bounds = array<i64: 1, 256>}, {transform_indices = @transform_7, window_bounds = array<i64: 128, 128>}, {transform_indices = @transform_8, window_bounds = array<i64: 128, 128>}]} {
    %c0 = arith.constant 0 : index
    %c0_0 = arith.constant 0 : index
    %0 = vector.load %arg1[%c0, %c0_0] : memref<128x32xf32, #tpu.memory_space<vmem>>, vector<128x32xf32>
    %c0_1 = arith.constant 0 : index
    %c0_2 = arith.constant 0 : index
    %1 = vector.load %arg2[%c0_1, %c0_2] : memref<32x32xf32, #tpu.memory_space<vmem>>, vector<32x32xf32>
    %cst = arith.constant dense<0.000000e+00> : vector<128x32xf32>
    %2 = tpu.matmul %0, %1, %cst {dimension_numbers = #tpu.dot_dimension_numbers<[1], [0], [0], [1], [0, 0, 1, 1], [], []>} : vector<128x32xf32>, vector<32x32xf32>, vector<128x32xf32> -> vector<128x32xf32>
    %c0_3 = arith.constant 0 : index
    %c0_4 = arith.constant 0 : index
    %3 = vector.load %arg3[%c0_3, %c0_4] : memref<1x32xf32, #tpu.memory_space<vmem>>, vector<1x32xf32>
    %4 = vector.broadcast %3 : vector<1x32xf32> to vector<128x32xf32>
    %5 = arith.addf %2, %4 : vector<128x32xf32>
    %cst_5 = arith.constant 0.000000e+00 : f32
    %6 = vector.broadcast %cst_5 : f32 to vector<128x32xf32>
    %7 = arith.maximumf %5, %6 : vector<128x32xf32>
    %c0_6 = arith.constant 0 : index
    %c0_7 = arith.constant 0 : index
    %8 = vector.load %arg4[%c0_6, %c0_7] : memref<32x32xf32, #tpu.memory_space<vmem>>, vector<32x32xf32>
    %cst_8 = arith.constant dense<0.000000e+00> : vector<128x32xf32>
    %9 = tpu.matmul %7, %8, %cst_8 {dimension_numbers = #tpu.dot_dimension_numbers<[1], [0], [0], [1], [0, 0, 1, 1], [], []>} : vector<128x32xf32>, vector<32x32xf32>, vector<128x32xf32> -> vector<128x32xf32>
    %c0_9 = arith.constant 0 : index
    %c0_10 = arith.constant 0 : index
    %10 = vector.load %arg5[%c0_9, %c0_10] : memref<1x32xf32, #tpu.memory_space<vmem>>, vector<1x32xf32>
    %11 = vector.broadcast %10 : vector<1x32xf32> to vector<128x32xf32>
    %12 = arith.addf %9, %11 : vector<128x32xf32>
    %cst_11 = arith.constant 0.000000e+00 : f32
    %13 = vector.broadcast %cst_11 : f32 to vector<128x32xf32>
    %14 = arith.maximumf %12, %13 : vector<128x32xf32>
    %c0_12 = arith.constant 0 : index
    %c0_13 = arith.constant 0 : index
    %15 = vector.load %arg6[%c0_12, %c0_13] : memref<32x256xf32, #tpu.memory_space<vmem>>, vector<32x256xf32>
    %cst_14 = arith.constant dense<0.000000e+00> : vector<128x256xf32>
    %16 = tpu.matmul %14, %15, %cst_14 {dimension_numbers = #tpu.dot_dimension_numbers<[1], [0], [0], [1], [0, 0, 1, 1], [], []>} : vector<128x32xf32>, vector<32x256xf32>, vector<128x256xf32> -> vector<128x256xf32>
    %c0_15 = arith.constant 0 : index
    %c0_16 = arith.constant 0 : index
    %17 = vector.load %arg7[%c0_15, %c0_16] : memref<1x256xf32, #tpu.memory_space<vmem>>, vector<1x256xf32>
    %18 = vector.broadcast %17 : vector<1x256xf32> to vector<128x256xf32>
    %19 = arith.addf %16, %18 : vector<128x256xf32>
    %20 = vector.extract_strided_slice %19 {offsets = [0, 0], sizes = [128, 128], strides = [1, 1]} : vector<128x256xf32> to vector<128x128xf32>
    %21 = vector.extract_strided_slice %19 {offsets = [0, 128], sizes = [128, 128], strides = [1, 1]} : vector<128x256xf32> to vector<128x128xf32>
    %22 = arith.mulf %20, %20 : vector<128x128xf32>
    %cst_17 = arith.constant dense<0.000000e+00> : vector<128xf32>
    %23 = vector.multi_reduction <add>, %22, %cst_17 [1] : vector<128x128xf32> to vector<128xf32>
    %24 = vector.shape_cast %23 : vector<128xf32> to vector<128x1xf32>
    %25 = math.sqrt %24 : vector<128x1xf32>
    %cst_18 = arith.constant 9.99999993E-9 : f32
    %26 = vector.broadcast %cst_18 : f32 to vector<128x1xf32>
    %27 = arith.maximumf %25, %26 : vector<128x1xf32>
    %28 = tpu.reciprocal %27 : vector<128x1xf32> -> vector<128x1xf32>
    %29 = vector.broadcast %28 : vector<128x1xf32> to vector<128x128xf32>
    %30 = arith.mulf %20, %29 : vector<128x128xf32>
    %c0_19 = arith.constant 0 : index
    %c0_20 = arith.constant 0 : index
    %31 = vector.load %arg8[%c0_19, %c0_20] : memref<128x128xf32, #tpu.memory_space<vmem>>, vector<128x128xf32>
    tpu.vector_store %arg8[%c0_19, %c0_20], %30 {strides = array<i32>} : memref<128x128xf32, #tpu.memory_space<vmem>>, vector<128x128xf32>,
    %cst_21 = arith.constant 0.000000e+00 : f32
    %32 = vector.broadcast %cst_21 : f32 to vector<128x128xf32>
    %33 = arith.cmpf olt, %21, %32 : vector<128x128xf32>
    %34 = math.exp %21 : vector<128x128xf32>
    %cst_22 = arith.constant 1.000000e+00 : f32
    %35 = vector.broadcast %cst_22 : f32 to vector<128x128xf32>
    %36 = arith.addf %21, %35 : vector<128x128xf32>
    %37 = arith.select %33, %34, %36 : vector<128x128xi1>, vector<128x128xf32>
    %c0_23 = arith.constant 0 : index
    %c0_24 = arith.constant 0 : index
    %38 = vector.load %arg9[%c0_23, %c0_24] : memref<128x128xf32, #tpu.memory_space<vmem>>, vector<128x128xf32>
    tpu.vector_store %arg9[%c0_23, %c0_24], %37 {strides = array<i32>} : memref<128x128xf32, #tpu.memory_space<vmem>>, vector<128x128xf32>,
    return
  }
  func.func @transform_0(%arg0: i32) -> (i32, i32) {
    %c0_i32 = arith.constant 0 : i32
    %c0_i32_0 = arith.constant 0 : i32
    return %arg0, %c0_i32 : i32, i32
  }
  func.func @transform_1(%arg0: i32) -> (i32, i32) {
    %c0_i32 = arith.constant 0 : i32
    %c0_i32_0 = arith.constant 0 : i32
    %c0_i32_1 = arith.constant 0 : i32
    return %c0_i32, %c0_i32_0 : i32, i32
  }
  func.func @transform_2(%arg0: i32) -> (i32, i32) {
    %c0_i32 = arith.constant 0 : i32
    %c0_i32_0 = arith.constant 0 : i32
    %c0_i32_1 = arith.constant 0 : i32
    return %c0_i32, %c0_i32_0 : i32, i32
  }
  func.func @transform_3(%arg0: i32) -> (i32, i32) {
    %c0_i32 = arith.constant 0 : i32
    %c0_i32_0 = arith.constant 0 : i32
    %c0_i32_1 = arith.constant 0 : i32
    return %c0_i32, %c0_i32_0 : i32, i32
  }
  func.func @transform_4(%arg0: i32) -> (i32, i32) {
    %c0_i32 = arith.constant 0 : i32
    %c0_i32_0 = arith.constant 0 : i32
    %c0_i32_1 = arith.constant 0 : i32
    return %c0_i32, %c0_i32_0 : i32, i32
  }
  func.func @transform_5(%arg0: i32) -> (i32, i32) {
    %c0_i32 = arith.constant 0 : i32
    %c0_i32_0 = arith.constant 0 : i32
    %c0_i32_1 = arith.constant 0 : i32
    return %c0_i32, %c0_i32_0 : i32, i32
  }
  func.func @transform_6(%arg0: i32) -> (i32, i32) {
    %c0_i32 = arith.constant 0 : i32
    %c0_i32_0 = arith.constant 0 : i32
    %c0_i32_1 = arith.constant 0 : i32
    return %c0_i32, %c0_i32_0 : i32, i32
  }
  func.func @transform_7(%arg0: i32) -> (i32, i32) {
    %c0_i32 = arith.constant 0 : i32
    %c0_i32_0 = arith.constant 0 : i32
    return %arg0, %c0_i32 : i32, i32
  }
  func.func @transform_8(%arg0: i32) -> (i32, i32) {
    %c0_i32 = arith.constant 0 : i32
    %c0_i32_0 = arith.constant 0 : i32
    return %arg0, %c0_i32 : i32, i32
  }
}

</mosaic_0001>

<llo_original>
// kernel: tpu_custom_call.1
$region0: #{tpu_custom_call.1}
  #allocation0 [shape = 'u32[]', space=smem, size = 0x4, offset = 0x4, fixed_abs, tag = 'smem constant byte address 0x4 - core index']
  #allocation1 [shape = 'u32[144,128]{1,0:T(1,128)}', space=vmem, size = 0x12000, scoped, tag = 'internal scratch']
  %s0 = inlined_call_operand.vmem [shape: f32[256,32], index: 0, kind: input, shape index: {}]
  %s1 = inlined_call_operand.vmem [shape: f32[32,32], index: 1, kind: input, shape index: {}]
  %s2 = inlined_call_operand.vmem [shape: f32[1,32], index: 2, kind: input, shape index: {}]
  %s3 = inlined_call_operand.vmem [shape: f32[32,32], index: 3, kind: input, shape index: {}]
  %s4 = inlined_call_operand.vmem [shape: f32[1,32], index: 4, kind: input, shape index: {}]
  %s5 = inlined_call_operand.vmem [shape: f32[32,256], index: 5, kind: input, shape index: {}]
  %s6 = inlined_call_operand.vmem [shape: f32[1,256], index: 6, kind: input, shape index: {}]
  %s7 = inlined_call_operand.hbm [shape: f32[256,128], index: 7, kind: output, shape index: {0}]
  %s8 = inlined_call_operand.hbm [shape: f32[256,128], index: 8, kind: output, shape index: {1}]
  %9 = xla_tuple %s7, %s8
  %s10 = sld [smem:[#allocation0]]
  $region69: #{tpu_custom_call.1} parent=0
    _
  %s12 = ssub.s32 1, %s10
  %s13 = scalar_select 0, %s12, %s10
  $region1: #{tpu_custom_call.1} parent=0
    #allocation2 [shape = 'u8[131072]{0}', space=vmem, size = 0x20000, scoped, tag = 'output window, operand 0']
    #allocation3 [shape = 's32[2]{0}', space=sflag, size = 0x8, scoped, tag = 'scoped memory for tpu_custom_call.1']
    #allocation4 [shape = 'u8[131072]{0}', space=vmem, size = 0x20000, scoped, tag = 'output window, operand 1']
    #allocation5 [shape = 's32[2]{0}', space=sflag, size = 0x8, scoped, tag = 'scoped memory for tpu_custom_call.1']
    %14 = vsyncpa [#allocation3], 0
    %s15 = scalar_lea.sflag [#allocation3], 1
    %16 = vsyncpa %s15, 0
    %17 = vsyncpa [#allocation5], 0
    %s18 = scalar_lea.sflag [#allocation5], 1
    %19 = vsyncpa %s18, 0
    loop: start=0, step=1, limit=4
    $region2: #{tpu_custom_call.1} parent=1 // loop_pre_header
      _
    $region3: #{tpu_custom_call.1} parent=1 // loop_header
      %s21 = sphi 0, %s25
      %p22 = scmp.ge.s32.totalorder %s21, 4
      %s31 = sphi 0, %s33
      %s34 = sphi 0, %s31
      %s35 = sphi 0, %s34
      %s51 = sphi 0, %s35
      %s55 = sphi 0, %s55
      %s57 = sphi 0, %s55
      %s58 = sphi 0, %s57
      %s72 = sphi 0, %s58
      %s76 = sphi 0, %s76
      %s78 = sphi 0, %s76
      %s79 = sphi 0, %s78
      %s93 = sphi 0, %s79
      %s97 = sphi 0, %s97
      %s99 = sphi 0, %s97
      %s100 = sphi 0, %s99
      %s114 = sphi 0, %s100
      %s118 = sphi 0, %s118
      %s120 = sphi 0, %s118
      %s121 = sphi 0, %s120
      %s135 = sphi 0, %s121
      %s139 = sphi 0, %s139
      %s141 = sphi 0, %s139
      %s142 = sphi 0, %s141
      %s156 = sphi 0, %s142
      %s160 = sphi 0, %s160
      %s162 = sphi 0, %s160
      %s163 = sphi 0, %s162
      %s177 = sphi 0, %s163
      %s183 = sphi 0, %s185
      %s186 = sphi 0, %s183
      %s187 = sphi 0, %s186
      %s203 = sphi 0, %s187
      %s209 = sphi 0, %s211
      %s212 = sphi 0, %s209
      %s213 = sphi 0, %s212
      %s229 = sphi 0, %s213
    $region4: #{tpu_custom_call.1} parent=1 // loop_header_branch
      %24 = sbr.rel (%p22) target = $region8
    $region5: #{tpu_custom_call.1} parent=1 // loop_body
      %s26 = ssub.s32 %s21, 1
      %s27 = ssub.s32 %s21, 2
      %s28 = sadd.s32 %s21, 1
      %s29 = ssub.s32 %s21, %s28
      %p30 = scmp.eq.s32.totalorder %s29, 0
      %s32 = sadd.s32 %s31, 1
      %s33 = scalar_select %p30, %s31, %s32
      %p36 = pneg %p30
      %p37 = scmp.eq.s32.totalorder %s21, 1
      %p38 = por %p36, %p37
      %p39 = scmp.ne.s32.totalorder %s31, %s34
      %p40 = scmp.eq.s32.totalorder %s21, 0
      %p41 = por %p39, %p40
      %p42 = scmp.ne.s32.totalorder %s31, %s34
      %p43 = scmp.eq.s32.totalorder %s26, 1
      %p44 = por %p42, %p43
      %p45 = scmp.ne.s32.totalorder %s34, %s35
      %p46 = scmp.eq.s32.totalorder %s26, 0
      %p47 = por %p45, %p46
      %p48 = scmp.ne.s32.totalorder %s34, %s35
      %p49 = scmp.eq.s32.totalorder %s27, 1
      %p50 = por %p48, %p49
      %p52 = scmp.ne.s32.totalorder %s35, %s51
      %p53 = scmp.eq.s32.totalorder %s27, 0
      %p54 = por %p52, %p53
      %s56 = sadd.s32 %s55, 1
      %p59 = scmp.eq.s32.totalorder %s21, 1
      %p60 = scmp.ne.s32.totalorder %s55, %s57
      %p61 = scmp.eq.s32.totalorder %s21, 0
      %p62 = por %p60, %p61
      %p63 = scmp.ne.s32.totalorder %s55, %s57
      %p64 = scmp.eq.s32.totalorder %s26, 1
      %p65 = por %p63, %p64
      %p66 = scmp.ne.s32.totalorder %s57, %s58
      %p67 = scmp.eq.s32.totalorder %s26, 0
      %p68 = por %p66, %p67
      %p69 = scmp.ne.s32.totalorder %s57, %s58
      %p70 = scmp.eq.s32.totalorder %s27, 1
      %p71 = por %p69, %p70
      %p73 = scmp.ne.s32.totalorder %s58, %s72
      %p74 = scmp.eq.s32.totalorder %s27, 0
      %p75 = por %p73, %p74
      %s77 = sadd.s32 %s76, 1
      %p80 = scmp.eq.s32.totalorder %s21, 1
      %p81 = scmp.ne.s32.totalorder %s76, %s78
      %p82 = scmp.eq.s32.totalorder %s21, 0
      %p83 = por %p81, %p82
      %p84 = scmp.ne.s32.totalorder %s76, %s78
      %p85 = scmp.eq.s32.totalorder %s26, 1
      %p86 = por %p84, %p85
      %p87 = scmp.ne.s32.totalorder %s78, %s79
      %p88 = scmp.eq.s32.totalorder %s26, 0
      %p89 = por %p87, %p88
      %p90 = scmp.ne.s32.totalorder %s78, %s79
      %p91 = scmp.eq.s32.totalorder %s27, 1
      %p92 = por %p90, %p91
      %p94 = scmp.ne.s32.totalorder %s79, %s93
      %p95 = scmp.eq.s32.totalorder %s27, 0
      %p96 = por %p94, %p95
      %s98 = sadd.s32 %s97, 1
      %p101 = scmp.eq.s32.totalorder %s21, 1
      %p102 = scmp.ne.s32.totalorder %s97, %s99
      %p103 = scmp.eq.s32.totalorder %s21, 0
      %p104 = por %p102, %p103
      %p105 = scmp.ne.s32.totalorder %s97, %s99
      %p106 = scmp.eq.s32.totalorder %s26, 1
      %p107 = por %p105, %p106
      %p108 = scmp.ne.s32.totalorder %s99, %s100
      %p109 = scmp.eq.s32.totalorder %s26, 0
      %p110 = por %p108, %p109
      %p111 = scmp.ne.s32.totalorder %s99, %s100
      %p112 = scmp.eq.s32.totalorder %s27, 1
      %p113 = por %p111, %p112
      %p115 = scmp.ne.s32.totalorder %s100, %s114
      %p116 = scmp.eq.s32.totalorder %s27, 0
      %p117 = por %p115, %p116
      %s119 = sadd.s32 %s118, 1
      %p122 = scmp.eq.s32.totalorder %s21, 1
      %p123 = scmp.ne.s32.totalorder %s118, %s120
      %p124 = scmp.eq.s32.totalorder %s21, 0
      %p125 = por %p123, %p124
      %p126 = scmp.ne.s32.totalorder %s118, %s120
      %p127 = scmp.eq.s32.totalorder %s26, 1
      %p128 = por %p126, %p127
      %p129 = scmp.ne.s32.totalorder %s120, %s121
      %p130 = scmp.eq.s32.totalorder %s26, 0
      %p131 = por %p129, %p130
      %p132 = scmp.ne.s32.totalorder %s120, %s121
      %p133 = scmp.eq.s32.totalorder %s27, 1
      %p134 = por %p132, %p133
      %p136 = scmp.ne.s32.totalorder %s121, %s135
      %p137 = scmp.eq.s32.totalorder %s27, 0
      %p138 = por %p136, %p137
      %s140 = sadd.s32 %s139, 1
      %p143 = scmp.eq.s32.totalorder %s21, 1
      %p144 = scmp.ne.s32.totalorder %s139, %s141
      %p145 = scmp.eq.s32.totalorder %s21, 0
      %p146 = por %p144, %p145
      %p147 = scmp.ne.s32.totalorder %s139, %s141
      %p148 = scmp.eq.s32.totalorder %s26, 1
      %p149 = por %p147, %p148
      %p150 = scmp.ne.s32.totalorder %s141, %s142
      %p151 = scmp.eq.s32.totalorder %s26, 0
      %p152 = por %p150, %p151
      %p153 = scmp.ne.s32.totalorder %s141, %s142
      %p154 = scmp.eq.s32.totalorder %s27, 1
      %p155 = por %p153, %p154
      %p157 = scmp.ne.s32.totalorder %s142, %s156
      %p158 = scmp.eq.s32.totalorder %s27, 0
      %p159 = por %p157, %p158
      %s161 = sadd.s32 %s160, 1
      %p164 = scmp.eq.s32.totalorder %s21, 1
      %p165 = scmp.ne.s32.totalorder %s160, %s162
      %p166 = scmp.eq.s32.totalorder %s21, 0
      %p167 = por %p165, %p166
      %p168 = scmp.ne.s32.totalorder %s160, %s162
      %p169 = scmp.eq.s32.totalorder %s26, 1
      %p170 = por %p168, %p169
      %p171 = scmp.ne.s32.totalorder %s162, %s163
      %p172 = scmp.eq.s32.totalorder %s26, 0
      %p173 = por %p171, %p172
      %p174 = scmp.ne.s32.totalorder %s162, %s163
      %p175 = scmp.eq.s32.totalorder %s27, 1
      %p176 = por %p174, %p175
      %p178 = scmp.ne.s32.totalorder %s163, %s177
      %p179 = scmp.eq.s32.totalorder %s27, 0
      %p180 = por %p178, %p179
      %s181 = ssub.s32 %s21, %s28
      %p182 = scmp.eq.s32.totalorder %s181, 0
      %s184 = sadd.s32 %s183, 1
      %s185 = scalar_select %p182, %s183, %s184
      %p188 = pneg %p182
      %p189 = scmp.eq.s32.totalorder %s21, 1
      %p190 = por %p188, %p189
      %p191 = scmp.ne.s32.totalorder %s183, %s186
      %p192 = scmp.eq.s32.totalorder %s21, 0
      %p193 = por %p191, %p192
      %p194 = scmp.ne.s32.totalorder %s183, %s186
      %p195 = scmp.eq.s32.totalorder %s26, 1
      %p196 = por %p194, %p195
      %p197 = scmp.ne.s32.totalorder %s186, %s187
      %p198 = scmp.eq.s32.totalorder %s26, 0
      %p199 = por %p197, %p198
      %p200 = scmp.ne.s32.totalorder %s186, %s187
      %p201 = scmp.eq.s32.totalorder %s27, 1
      %p202 = por %p200, %p201
      %p204 = scmp.ne.s32.totalorder %s187, %s203
      %p205 = scmp.eq.s32.totalorder %s27, 0
      %p206 = por %p204, %p205
      %s207 = ssub.s32 %s21, %s28
      %p208 = scmp.eq.s32.totalorder %s207, 0
      %s210 = sadd.s32 %s209, 1
      %s211 = scalar_select %p208, %s209, %s210
      %p214 = pneg %p208
      %p215 = scmp.eq.s32.totalorder %s21, 1
      %p216 = por %p214, %p215
      %p217 = scmp.ne.s32.totalorder %s209, %s212
      %p218 = scmp.eq.s32.totalorder %s21, 0
      %p219 = por %p217, %p218
      %p220 = scmp.ne.s32.totalorder %s209, %s212
      %p221 = scmp.eq.s32.totalorder %s26, 1
      %p222 = por %p220, %p221
      %p223 = scmp.ne.s32.totalorder %s212, %s213
      %p224 = scmp.eq.s32.totalorder %s26, 0
      %p225 = por %p223, %p224
      %p226 = scmp.ne.s32.totalorder %s212, %s213
      %p227 = scmp.eq.s32.totalorder %s27, 1
      %p228 = por %p226, %p227
      %p230 = scmp.ne.s32.totalorder %s213, %s229
      %p231 = scmp.eq.s32.totalorder %s27, 0
      %p232 = por %p230, %p231
      %p233 = scmp.le.s32.totalorder 1, %s21
      %p234 = scmp.lt.s32.totalorder %s21, 3
      %p235 = pnand %p233, %p234
      %p236 = pneg %p235
      // Predicated region
      $region9: #{tpu_custom_call.1} parent=5 // pred_check
        _
      $region10: #{tpu_custom_call.1} parent=5 // pred_check_branch
        %238 = sbr.rel (%p235) target = $region12
      $region11: #{tpu_custom_call.1} parent=5 // pred_region
        %s239 = ssub.s32 %s21, 1
        // Predicated region
        $region13: #{tpu_custom_call.1} parent=11 // pred_check
          %p240 = pneg %p68
        $region14: #{tpu_custom_call.1} parent=11 // pred_check_branch
          %242 = sbr.rel (%p240) target = $region16
        $region15: #{tpu_custom_call.1} parent=11 // pred_region
          _
        $region16: #{tpu_custom_call.1} parent=11 // pred_fallthru
          _
        // Predicated region
        $region17: #{tpu_custom_call.1} parent=11 // pred_check
          %p243 = pneg %p89
        $region18: #{tpu_custom_call.1} parent=11 // pred_check_branch
          %245 = sbr.rel (%p243) target = $region20
        $region19: #{tpu_custom_call.1} parent=11 // pred_region
          _
        $region20: #{tpu_custom_call.1} parent=11 // pred_fallthru
          _
        // Predicated region
        $region21: #{tpu_custom_call.1} parent=11 // pred_check
          %p246 = pneg %p110
        $region22: #{tpu_custom_call.1} parent=11 // pred_check_branch
          %248 = sbr.rel (%p246) target = $region24
        $region23: #{tpu_custom_call.1} parent=11 // pred_region
          _
        $region24: #{tpu_custom_call.1} parent=11 // pred_fallthru
          _
        // Predicated region
        $region25: #{tpu_custom_call.1} parent=11 // pred_check
          %p249 = pneg %p131
        $region26: #{tpu_custom_call.1} parent=11 // pred_check_branch
          %251 = sbr.rel (%p249) target = $region28
        $region27: #{tpu_custom_call.1} parent=11 // pred_region
          _
        $region28: #{tpu_custom_call.1} parent=11 // pred_fallthru
          _
        // Predicated region
        $region29: #{tpu_custom_call.1} parent=11 // pred_check
          %p252 = pneg %p152
        $region30: #{tpu_custom_call.1} parent=11 // pred_check_branch
          %254 = sbr.rel (%p252) target = $region32
        $region31: #{tpu_custom_call.1} parent=11 // pred_region
          _
        $region32: #{tpu_custom_call.1} parent=11 // pred_fallthru
          _
        // Predicated region
        $region33: #{tpu_custom_call.1} parent=11 // pred_check
          %p255 = pneg %p173
        $region34: #{tpu_custom_call.1} parent=11 // pred_check_branch
          %257 = sbr.rel (%p255) target = $region36
        $region35: #{tpu_custom_call.1} parent=11 // pred_region
          _
        $region36: #{tpu_custom_call.1} parent=11 // pred_fallthru
          _
      $region12: #{tpu_custom_call.1} parent=5 // pred_fallthru
        _
      %p258 = scmp.lt.s32.totalorder %s21, 2
      // Predicated region
      $region37: #{tpu_custom_call.1} parent=5 // pred_check
        %p259 = pneg %p258
      $region38: #{tpu_custom_call.1} parent=5 // pred_check_branch
        %261 = sbr.rel (%p259) target = $region40
      $region39: #{tpu_custom_call.1} parent=5 // pred_region
        // Predicated region
        $region41: #{tpu_custom_call.1} parent=39 // pred_check
          %p262 = pneg %p41
        $region42: #{tpu_custom_call.1} parent=39 // pred_check_branch
          %264 = sbr.rel (%p262) target = $region44
        $region43: #{tpu_custom_call.1} parent=39 // pred_region
          %s265 = smul.u32 16, %s21
          %p266 = scmp.lt.s32.totalorder %s265, 31
          %s267 = scalar_select %p266, %s265, 31
          %s268 = smul.addr %s267, 8
          %s269 = scalar_lea.vmem %s0, %s268
          %s270 = smul.u32 16, %s21
        $region44: #{tpu_custom_call.1} parent=39 // pred_fallthru
          _
      $region40: #{tpu_custom_call.1} parent=5 // pred_fallthru
        _
      %p271 = scmp.le.s32.totalorder 1, %s21
      %p272 = scmp.lt.s32.totalorder %s21, 3
      %p273 = pnand %p271, %p272
      %p274 = pneg %p273
      // Predicated region
      $region45: #{tpu_custom_call.1} parent=5 // pred_check
        _
      $region46: #{tpu_custom_call.1} parent=5 // pred_check_branch
        %276 = sbr.rel (%p273) target = $region48
      $region47: #{tpu_custom_call.1} parent=5 // pred_region
        %s277 = ssub.s32 %s21, 1
        %s278 = smul.u32 16, %s26
        %p279 = scmp.lt.s32.totalorder %s278, 31
        %s280 = scalar_select %p279, %s278, 31
        %s281 = smul.addr %s280, 8
        %s282 = scalar_lea.vmem %s0, %s281
        %p283 = pneg %p47
        %p284 = pneg %p44
        %p285 = pneg %p68
        %p286 = pneg %p65
        %p287 = pneg %p89
        %p288 = pneg %p86
        %p289 = pneg %p110
        %p290 = pneg %p107
        %p291 = pneg %p131
        %p292 = pneg %p128
        %p293 = pneg %p152
        %p294 = pneg %p149
        %p295 = pneg %p173
        %p296 = pneg %p170
        %p297 = pneg %p199
        %p298 = pneg %p196
        %s299 = sand.u32 %s186, 1
        %s300 = scalar_lea.sflag [#allocation3], %s299
        %s301 = sand.u32 %s186, 1
        %s302 = smul.addr %s301, 128
        %s303 = scalar_lea.vmem [#allocation2], %s302
        %p304 = pneg %p225
        %p305 = pneg %p222
        %s306 = sand.u32 %s212, 1
        %s307 = scalar_lea.sflag [#allocation5], %s306
        %s308 = sand.u32 %s212, 1
        %s309 = smul.addr %s308, 128
        %s310 = scalar_lea.vmem [#allocation4], %s309
        %s311 = smul.u32 16, %s26
        %p312 = scmp.lt.s32.totalorder %s311, 31
        %s313 = scalar_select %p312, %s311, 31
        %s314 = smul.addr %s313, 8
        %s315 = scalar_lea.vmem %s0, %s314
        %s316 = smul.u32 16, %s26
        %s317 = smul.u32 16, %s26
        %s318 = smul.u32 16, %s26
        %v319 = vld [vmem:[%s315] sm:$0xff]
        %v320 = vld [vmem:[%s315 + $0x8] sm:$0xff]
        %v321 = vld [vmem:[%s315 + $0x10] sm:$0xff]
        %v322 = vld [vmem:[%s315 + $0x18] sm:$0xff]
        %v323 = vld [vmem:[%s315 + $0x20] sm:$0xff]
        %v324 = vld [vmem:[%s315 + $0x28] sm:$0xff]
        %v325 = vld [vmem:[%s315 + $0x30] sm:$0xff]
        %v326 = vld [vmem:[%s315 + $0x38] sm:$0xff]
        %v327 = vld [vmem:[%s315 + $0x40] sm:$0xff]
        %v328 = vld [vmem:[%s315 + $0x48] sm:$0xff]
        %v329 = vld [vmem:[%s315 + $0x50] sm:$0xff]
        %v330 = vld [vmem:[%s315 + $0x58] sm:$0xff]
        %v331 = vld [vmem:[%s315 + $0x60] sm:$0xff]
        %v332 = vld [vmem:[%s315 + $0x68] sm:$0xff]
        %v333 = vld [vmem:[%s315 + $0x70] sm:$0xff]
        %v334 = vld [vmem:[%s315 + $0x78] sm:$0xff]
        %v335 = vld [vmem:[%s1] sm:$0xff]
        %v336 = vld [vmem:[%s1 + $0x8] sm:$0xff]
        %v337 = vld [vmem:[%s1 + $0x10] sm:$0xff]
        %v338 = vld [vmem:[%s1 + $0x18] sm:$0xff]
        %v339 = vld [vmem:[%s2] sm:$0x1]
        %v341 = vlaneseq
        %v342 = vshrl.u32 %v341, 7
        %v343 = vsub.s32 0, %v342
        %v344 = vrot.slane %v339, %v343
        %vm346 = vcmask 261120
        %v348 = vsel %vm346, %v319, 0
        %v351 = vsel %vm346, %v320, 0
        %v354 = vsel %vm346, %v321, 0
        %v357 = vsel %vm346, %v322, 0
        %v360 = vsel %vm346, %v323, 0
        %v363 = vsel %vm346, %v324, 0
        %v366 = vsel %vm346, %v325, 0
        %v369 = vsel %vm346, %v326, 0
        %v372 = vsel %vm346, %v327, 0
        %v375 = vsel %vm346, %v328, 0
        %v378 = vsel %vm346, %v329, 0
        %v381 = vsel %vm346, %v330, 0
        %v384 = vsel %vm346, %v331, 0
        %v387 = vsel %vm346, %v332, 0
        %v390 = vsel %vm346, %v333, 0
        %v393 = vsel %vm346, %v334, 0
        %395 = vmatprep.subr.mxu0 0.0
        %396 = vmatpush1.msra.mxu0 %v335
        %397 = vmatprep.subr.mxu0 0.0
        %398 = vmatpush1.msra.mxu0 %v336
        %399 = vmatprep.subr.mxu0 0.0
        %400 = vmatpush1.msra.mxu0 %v337
        %401 = vmatprep.subr.mxu0 0.0
        %402 = vmatpush1.msra.mxu0 %v338
        %403 = vmatprep.subr.mxu0 0.0
        %404 = vmatpush1.msra.mxu0 0.0
        %405 = vmatprep.subr.mxu0 0.0
        %406 = vmatpush1.msra.mxu0 0.0
        %407 = vmatprep.subr.mxu0 0.0
        %408 = vmatpush1.msra.mxu0 0.0
        %409 = vmatprep.subr.mxu0 0.0
        %410 = vmatpush1.msra.mxu0 0.0
        %411 = vmatprep.subr.mxu0 0.0
        %412 = vmatpush1.msra.mxu0 0.0
        %413 = vmatprep.subr.mxu0 0.0
        %414 = vmatpush1.msra.mxu0 0.0
        %415 = vmatprep.subr.mxu0 0.0
        %416 = vmatpush1.msra.mxu0 0.0
        %417 = vmatprep.subr.mxu0 0.0
        %418 = vmatpush1.msra.mxu0 0.0
        %419 = vmatprep.subr.mxu0 0.0
        %420 = vmatpush1.msra.mxu0 0.0
        %421 = vmatprep.subr.mxu0 0.0
        %422 = vmatpush1.msra.mxu0 0.0
        %423 = vmatprep.subr.mxu0 0.0
        %424 = vmatpush1.msra.mxu0 0.0
        %425 = vmatprep.subr.mxu0 0.0
        %426 = vmatpush1.msra.mxu0 0.0
        %427 = vmatprep.subr.mxu0 0.0
        %428 = vmatpush1.msra.mxu0 0.0
        %429 = vmatprep.subr.mxu0 0.0
        %430 = vmatpush1.msra.mxu0 0.0
        %431 = vmatprep.subr.mxu0 0.0
        %432 = vmatpush1.msra.mxu0 0.0
        %433 = vmatprep.subr.mxu0 0.0
        %434 = vmatpush1.msra.mxu0 0.0
        %435 = vmatprep.subr.mxu0 0.0
        %436 = vmatpush1.msra.mxu0 0.0
        %437 = vmatprep.subr.mxu0 0.0
        %438 = vmatpush1.msra.mxu0 0.0
        %439 = vmatprep.subr.mxu0 0.0
        %440 = vmatpush1.msra.mxu0 0.0
        %441 = vmatprep.subr.mxu0 0.0
        %442 = vmatpush1.msra.mxu0 0.0
        %443 = vmatprep.subr.mxu0 0.0
        %444 = vmatpush1.msra.mxu0 0.0
        %445 = vmatprep.subr.mxu0 0.0
        %446 = vmatpush1.msra.mxu0 0.0
        %447 = vmatprep.subr.mxu0 0.0
        %448 = vmatpush1.msra.mxu0 0.0
        %449 = vmatprep.subr.mxu0 0.0
        %450 = vmatpush1.msra.mxu0 0.0
        %451 = vmatprep.subr.mxu0 0.0
        %452 = vmatpush1.msra.mxu0 0.0
        %453 = vmatprep.subr.mxu0 0.0
        %454 = vmatpush1.msra.mxu0 0.0
        %455 = vmatprep.subr.mxu0 0.0
        %456 = vmatpush1.msra.mxu0 0.0
        %457 = vmatprep.subr.mxu0 0.0
        %458 = vmatpush1.msra.mxu0 0.0
        %459 = vmatprep.mubr.f32.mxu0 0.0
        %460 = vmatmul.mubr.f32.gmra.mrb[0].mxu0 %v348
        %v461 = vpop.f32.mrb[0].mxu0
        %v462 = vadd.f32 %v344, %v461
        %v463 = vpop.f32.mrb[0].mxu0
        %464 = vmatprep.mubr.f32.mxu0 0.0
        %465 = vmatmul.mubr.f32.gmra.mrb[0].mxu0 %v351
        %v466 = vpop.f32.mrb[0].mxu0
        %v467 = vadd.f32 %v344, %v466
        %v468 = vpop.f32.mrb[0].mxu0
        %469 = vmatprep.mubr.f32.mxu0 0.0
        %470 = vmatmul.mubr.f32.gmra.mrb[0].mxu0 %v354
        %v471 = vpop.f32.mrb[0].mxu0
        %v472 = vadd.f32 %v344, %v471
        %v473 = vpop.f32.mrb[0].mxu0
        %474 = vmatprep.mubr.f32.mxu0 0.0
        %475 = vmatmul.mubr.f32.gmra.mrb[0].mxu0 %v357
        %v476 = vpop.f32.mrb[0].mxu0
        %v477 = vadd.f32 %v344, %v476
        %v478 = vpop.f32.mrb[0].mxu0
        %479 = vmatprep.mubr.f32.mxu0 0.0
        %480 = vmatmul.mubr.f32.gmra.mrb[0].mxu0 %v360
        %v481 = vpop.f32.mrb[0].mxu0
        %v482 = vadd.f32 %v344, %v481
        %v483 = vpop.f32.mrb[0].mxu0
        %484 = vmatprep.mubr.f32.mxu0 0.0
        %485 = vmatmul.mubr.f32.gmra.mrb[0].mxu0 %v363
        %v486 = vpop.f32.mrb[0].mxu0
        %v487 = vadd.f32 %v344, %v486
        %v488 = vpop.f32.mrb[0].mxu0
        %489 = vmatprep.mubr.f32.mxu0 0.0
        %490 = vmatmul.mubr.f32.gmra.mrb[0].mxu0 %v366
        %v491 = vpop.f32.mrb[0].mxu0
        %v492 = vadd.f32 %v344, %v491
        %v493 = vpop.f32.mrb[0].mxu0
        %494 = vmatprep.mubr.f32.mxu0 0.0
        %495 = vmatmul.mubr.f32.gmra.mrb[0].mxu0 %v369
        %v496 = vpop.f32.mrb[0].mxu0
        %v497 = vadd.f32 %v344, %v496
        %v498 = vpop.f32.mrb[0].mxu0
        %499 = vmatprep.mubr.f32.mxu0 0.0
        %500 = vmatmul.mubr.f32.gmra.mrb[0].mxu0 %v372
        %v501 = vpop.f32.mrb[0].mxu0
        %v502 = vadd.f32 %v344, %v501
        %v503 = vpop.f32.mrb[0].mxu0
        %504 = vmatprep.mubr.f32.mxu0 0.0
        %505 = vmatmul.mubr.f32.gmra.mrb[0].mxu0 %v375
        %v506 = vpop.f32.mrb[0].mxu0
        %v507 = vadd.f32 %v344, %v506
        %v508 = vpop.f32.mrb[0].mxu0
        %509 = vmatprep.mubr.f32.mxu0 0.0
        %510 = vmatmul.mubr.f32.gmra.mrb[0].mxu0 %v378
        %v511 = vpop.f32.mrb[0].mxu0
        %v512 = vadd.f32 %v344, %v511
        %v513 = vpop.f32.mrb[0].mxu0
        %514 = vmatprep.mubr.f32.mxu0 0.0
        %515 = vmatmul.mubr.f32.gmra.mrb[0].mxu0 %v381
        %v516 = vpop.f32.mrb[0].mxu0
        %v517 = vadd.f32 %v344, %v516
        %v518 = vpop.f32.mrb[0].mxu0
        %519 = vmatprep.mubr.f32.mxu0 0.0
        %520 = vmatmul.mubr.f32.gmra.mrb[0].mxu0 %v384
        %v521 = vpop.f32.mrb[0].mxu0
        %v522 = vadd.f32 %v344, %v521
        %v523 = vpop.f32.mrb[0].mxu0
        %524 = vmatprep.mubr.f32.mxu0 0.0
        %525 = vmatmul.mubr.f32.gmra.mrb[0].mxu0 %v387
        %v526 = vpop.f32.mrb[0].mxu0
        %v527 = vadd.f32 %v344, %v526
        %v528 = vpop.f32.mrb[0].mxu0
        %529 = vmatprep.mubr.f32.mxu0 0.0
        %530 = vmatmul.mubr.f32.gmra.mrb[0].mxu0 %v390
        %v531 = vpop.f32.mrb[0].mxu0
        %v532 = vadd.f32 %v344, %v531
        %v533 = vpop.f32.mrb[0].mxu0
        %534 = vmatprep.mubr.f32.mxu0 0.0
        %535 = vmatmul.mubr.f32.gmra.mrb[0].mxu0 %v393
        %v536 = vpop.f32.mrb[0].mxu0
        %v537 = vadd.f32 %v344, %v536
        %v538 = vpop.f32.mrb[0].mxu0
        %539 = vdwg.mxu0
        %v540 = vmax.f32 %v462, 0.0
        %v541 = vmax.f32 %v467, 0.0
        %v542 = vmax.f32 %v472, 0.0
        %v543 = vmax.f32 %v477, 0.0
        %v544 = vmax.f32 %v482, 0.0
        %v545 = vmax.f32 %v487, 0.0
        %v546 = vmax.f32 %v492, 0.0
        %v547 = vmax.f32 %v497, 0.0
        %v548 = vmax.f32 %v502, 0.0
        %v549 = vmax.f32 %v507, 0.0
        %v550 = vmax.f32 %v512, 0.0
        %v551 = vmax.f32 %v517, 0.0
        %v552 = vmax.f32 %v522, 0.0
        %v553 = vmax.f32 %v527, 0.0
        %v554 = vmax.f32 %v532, 0.0
        %v555 = vmax.f32 %v537, 0.0
        %v556 = vld [vmem:[%s3] sm:$0xff]
        %v557 = vld [vmem:[%s3 + $0x8] sm:$0xff]
        %v558 = vld [vmem:[%s3 + $0x10] sm:$0xff]
        %v559 = vld [vmem:[%s3 + $0x18] sm:$0xff]
        %v560 = vld [vmem:[%s4] sm:$0x1]
        %v562 = vlaneseq
        %v563 = vshrl.u32 %v562, 7
        %v564 = vsub.s32 0, %v563
        %v565 = vrot.slane %v560, %v564
        %v568 = vsel %vm346, %v540, 0
        %v571 = vsel %vm346, %v541, 0
        %v574 = vsel %vm346, %v542, 0
        %v577 = vsel %vm346, %v543, 0
        %v580 = vsel %vm346, %v544, 0
        %v583 = vsel %vm346, %v545, 0
        %v586 = vsel %vm346, %v546, 0
        %v589 = vsel %vm346, %v547, 0
        %v592 = vsel %vm346, %v548, 0
        %v595 = vsel %vm346, %v549, 0
        %v598 = vsel %vm346, %v550, 0
        %v601 = vsel %vm346, %v551, 0
        %v604 = vsel %vm346, %v552, 0
        %v607 = vsel %vm346, %v553, 0
        %v610 = vsel %vm346, %v554, 0
        %v613 = vsel %vm346, %v555, 0
        %615 = vmatprep.subr.mxu0 0.0
        %616 = vmatpush1.msra.mxu0 %v556
        %617 = vmatprep.subr.mxu0 0.0
        %618 = vmatpush1.msra.mxu0 %v557
        %619 = vmatprep.subr.mxu0 0.0
        %620 = vmatpush1.msra.mxu0 %v558
        %621 = vmatprep.subr.mxu0 0.0
        %622 = vmatpush1.msra.mxu0 %v559
        %623 = vmatprep.subr.mxu0 0.0
        %624 = vmatpush1.msra.mxu0 0.0
        %625 = vmatprep.subr.mxu0 0.0
        %626 = vmatpush1.msra.mxu0 0.0
        %627 = vmatprep.subr.mxu0 0.0
        %628 = vmatpush1.msra.mxu0 0.0
        %629 = vmatprep.subr.mxu0 0.0
        %630 = vmatpush1.msra.mxu0 0.0
        %631 = vmatprep.subr.mxu0 0.0
        %632 = vmatpush1.msra.mxu0 0.0
        %633 = vmatprep.subr.mxu0 0.0
        %634 = vmatpush1.msra.mxu0 0.0
        %635 = vmatprep.subr.mxu0 0.0
        %636 = vmatpush1.msra.mxu0 0.0
        %637 = vmatprep.subr.mxu0 0.0
        %638 = vmatpush1.msra.mxu0 0.0
        %639 = vmatprep.subr.mxu0 0.0
        %640 = vmatpush1.msra.mxu0 0.0
        %641 = vmatprep.subr.mxu0 0.0
        %642 = vmatpush1.msra.mxu0 0.0
        %643 = vmatprep.subr.mxu0 0.0
        %644 = vmatpush1.msra.mxu0 0.0
        %645 = vmatprep.subr.mxu0 0.0
        %646 = vmatpush1.msra.mxu0 0.0
        %647 = vmatprep.subr.mxu0 0.0
        %648 = vmatpush1.msra.mxu0 0.0
        %649 = vmatprep.subr.mxu0 0.0
        %650 = vmatpush1.msra.mxu0 0.0
        %651 = vmatprep.subr.mxu0 0.0
        %652 = vmatpush1.msra.mxu0 0.0
        %653 = vmatprep.subr.mxu0 0.0
        %654 = vmatpush1.msra.mxu0 0.0
        %655 = vmatprep.subr.mxu0 0.0
        %656 = vmatpush1.msra.mxu0 0.0
        %657 = vmatprep.subr.mxu0 0.0
        %658 = vmatpush1.msra.mxu0 0.0
        %659 = vmatprep.subr.mxu0 0.0
        %660 = vmatpush1.msra.mxu0 0.0
        %661 = vmatprep.subr.mxu0 0.0
        %662 = vmatpush1.msra.mxu0 0.0
        %663 = vmatprep.subr.mxu0 0.0
        %664 = vmatpush1.msra.mxu0 0.0
        %665 = vmatprep.subr.mxu0 0.0
        %666 = vmatpush1.msra.mxu0 0.0
        %667 = vmatprep.subr.mxu0 0.0
        %668 = vmatpush1.msra.mxu0 0.0
        %669 = vmatprep.subr.mxu0 0.0
        %670 = vmatpush1.msra.mxu0 0.0
        %671 = vmatprep.subr.mxu0 0.0
        %672 = vmatpush1.msra.mxu0 0.0
        %673 = vmatprep.subr.mxu0 0.0
        %674 = vmatpush1.msra.mxu0 0.0
        %675 = vmatprep.subr.mxu0 0.0
        %676 = vmatpush1.msra.mxu0 0.0
        %677 = vmatprep.subr.mxu0 0.0
        %678 = vmatpush1.msra.mxu0 0.0
        %679 = vmatprep.mubr.f32.mxu0 0.0
        %680 = vmatmul.mubr.f32.gmra.mrb[0].mxu0 %v568
        %v681 = vpop.f32.mrb[0].mxu0
        %v682 = vadd.f32 %v565, %v681
        %v683 = vpop.f32.mrb[0].mxu0
        %684 = vmatprep.mubr.f32.mxu0 0.0
        %685 = vmatmul.mubr.f32.gmra.mrb[0].mxu0 %v571
        %v686 = vpop.f32.mrb[0].mxu0
        %v687 = vadd.f32 %v565, %v686
        %v688 = vpop.f32.mrb[0].mxu0
        %689 = vmatprep.mubr.f32.mxu0 0.0
        %690 = vmatmul.mubr.f32.gmra.mrb[0].mxu0 %v574
        %v691 = vpop.f32.mrb[0].mxu0
        %v692 = vadd.f32 %v565, %v691
        %v693 = vpop.f32.mrb[0].mxu0
        %694 = vmatprep.mubr.f32.mxu0 0.0
        %695 = vmatmul.mubr.f32.gmra.mrb[0].mxu0 %v577
        %v696 = vpop.f32.mrb[0].mxu0
        %v697 = vadd.f32 %v565, %v696
        %v698 = vpop.f32.mrb[0].mxu0
        %699 = vmatprep.mubr.f32.mxu0 0.0
        %700 = vmatmul.mubr.f32.gmra.mrb[0].mxu0 %v580
        %v701 = vpop.f32.mrb[0].mxu0
        %v702 = vadd.f32 %v565, %v701
        %v703 = vpop.f32.mrb[0].mxu0
        %704 = vmatprep.mubr.f32.mxu0 0.0
        %705 = vmatmul.mubr.f32.gmra.mrb[0].mxu0 %v583
        %v706 = vpop.f32.mrb[0].mxu0
        %v707 = vadd.f32 %v565, %v706
        %v708 = vpop.f32.mrb[0].mxu0
        %709 = vmatprep.mubr.f32.mxu0 0.0
        %710 = vmatmul.mubr.f32.gmra.mrb[0].mxu0 %v586
        %v711 = vpop.f32.mrb[0].mxu0
        %v712 = vadd.f32 %v565, %v711
        %v713 = vpop.f32.mrb[0].mxu0
        %714 = vmatprep.mubr.f32.mxu0 0.0
        %715 = vmatmul.mubr.f32.gmra.mrb[0].mxu0 %v589
        %v716 = vpop.f32.mrb[0].mxu0
        %v717 = vadd.f32 %v565, %v716
        %v718 = vpop.f32.mrb[0].mxu0
        %719 = vmatprep.mubr.f32.mxu0 0.0
        %720 = vmatmul.mubr.f32.gmra.mrb[0].mxu0 %v592
        %v721 = vpop.f32.mrb[0].mxu0
        %v722 = vadd.f32 %v565, %v721
        %v723 = vpop.f32.mrb[0].mxu0
        %724 = vmatprep.mubr.f32.mxu0 0.0
        %725 = vmatmul.mubr.f32.gmra.mrb[0].mxu0 %v595
        %v726 = vpop.f32.mrb[0].mxu0
        %v727 = vadd.f32 %v565, %v726
        %v728 = vpop.f32.mrb[0].mxu0
        %729 = vmatprep.mubr.f32.mxu0 0.0
        %730 = vmatmul.mubr.f32.gmra.mrb[0].mxu0 %v598
        %v731 = vpop.f32.mrb[0].mxu0
        %v732 = vadd.f32 %v565, %v731
        %v733 = vpop.f32.mrb[0].mxu0
        %734 = vmatprep.mubr.f32.mxu0 0.0
        %735 = vmatmul.mubr.f32.gmra.mrb[0].mxu0 %v601
        %v736 = vpop.f32.mrb[0].mxu0
        %v737 = vadd.f32 %v565, %v736
        %v738 = vpop.f32.mrb[0].mxu0
        %739 = vmatprep.mubr.f32.mxu0 0.0
        %740 = vmatmul.mubr.f32.gmra.mrb[0].mxu0 %v604
        %v741 = vpop.f32.mrb[0].mxu0
        %v742 = vadd.f32 %v565, %v741
        %v743 = vpop.f32.mrb[0].mxu0
        %744 = vmatprep.mubr.f32.mxu0 0.0
        %745 = vmatmul.mubr.f32.gmra.mrb[0].mxu0 %v607
        %v746 = vpop.f32.mrb[0].mxu0
        %v747 = vadd.f32 %v565, %v746
        %v748 = vpop.f32.mrb[0].mxu0
        %749 = vmatprep.mubr.f32.mxu0 0.0
        %750 = vmatmul.mubr.f32.gmra.mrb[0].mxu0 %v610
        %v751 = vpop.f32.mrb[0].mxu0
        %v752 = vadd.f32 %v565, %v751
        %v753 = vpop.f32.mrb[0].mxu0
        %754 = vmatprep.mubr.f32.mxu0 0.0
        %755 = vmatmul.mubr.f32.gmra.mrb[0].mxu0 %v613
        %v756 = vpop.f32.mrb[0].mxu0
        %v757 = vadd.f32 %v565, %v756
        %v758 = vpop.f32.mrb[0].mxu0
        %759 = vdwg.mxu0
        %v760 = vmax.f32 %v682, 0.0
        %v761 = vmax.f32 %v687, 0.0
        %v762 = vmax.f32 %v692, 0.0
        %v763 = vmax.f32 %v697, 0.0
        %v764 = vmax.f32 %v702, 0.0
        %v765 = vmax.f32 %v707, 0.0
        %v766 = vmax.f32 %v712, 0.0
        %v767 = vmax.f32 %v717, 0.0
        %v768 = vmax.f32 %v722, 0.0
        %v769 = vmax.f32 %v727, 0.0
        %v770 = vmax.f32 %v732, 0.0
        %v771 = vmax.f32 %v737, 0.0
        %v772 = vmax.f32 %v742, 0.0
        %v773 = vmax.f32 %v747, 0.0
        %v774 = vmax.f32 %v752, 0.0
        %v775 = vmax.f32 %v757, 0.0
        %v776 = vld [vmem:[%s5] sm:$0xff]
        %v777 = vld [vmem:[%s5 + $0x8] sm:$0xff]
        %v778 = vld [vmem:[%s5 + $0x10] sm:$0xff]
        %v779 = vld [vmem:[%s5 + $0x18] sm:$0xff]
        %v780 = vld [vmem:[%s5 + $0x20] sm:$0xff]
        %v781 = vld [vmem:[%s5 + $0x28] sm:$0xff]
        %v782 = vld [vmem:[%s5 + $0x30] sm:$0xff]
        %v783 = vld [vmem:[%s5 + $0x38] sm:$0xff]
        %v784 = vld [vmem:[%s6] sm:$0x3]
        %v786 = vlaneseq
        %v787 = vshrl.u32 %v786, 7
        %v788 = vsub.s32 0, %v787
        %v789 = vrot.slane %v784, %v788
        %v790 = vlaneseq
        %v791 = vshrl.u32 %v790, 7
        %v792 = vsub.s32 1, %v791
        %v793 = vrot.slane %v784, %v792
        %v797 = vsel %vm346, %v760, 0
        %v800 = vsel %vm346, %v761, 0
        %v803 = vsel %vm346, %v762, 0
        %v806 = vsel %vm346, %v763, 0
        %v809 = vsel %vm346, %v764, 0
        %v812 = vsel %vm346, %v765, 0
        %v815 = vsel %vm346, %v766, 0
        %v818 = vsel %vm346, %v767, 0
        %v821 = vsel %vm346, %v768, 0
        %v824 = vsel %vm346, %v769, 0
        %v827 = vsel %vm346, %v770, 0
        %v830 = vsel %vm346, %v771, 0
        %v833 = vsel %vm346, %v772, 0
        %v836 = vsel %vm346, %v773, 0
        %v839 = vsel %vm346, %v774, 0
        %v842 = vsel %vm346, %v775, 0
        %844 = vmatprep.subr.mxu0 %v777
        %845 = vmatpush1.msra.mxu0 %v776
        %846 = vmatprep.subr.mxu0 %v779
        %847 = vmatpush1.msra.mxu0 %v778
        %848 = vmatprep.subr.mxu0 %v781
        %849 = vmatpush1.msra.mxu0 %v780
        %850 = vmatprep.subr.mxu0 %v783
        %851 = vmatpush1.msra.mxu0 %v782
        %852 = vmatprep.subr.mxu0 0.0
        %853 = vmatpush1.msra.mxu0 0.0
        %854 = vmatprep.subr.mxu0 0.0
        %855 = vmatpush1.msra.mxu0 0.0
        %856 = vmatprep.subr.mxu0 0.0
        %857 = vmatpush1.msra.mxu0 0.0
        %858 = vmatprep.subr.mxu0 0.0
        %859 = vmatpush1.msra.mxu0 0.0
        %860 = vmatprep.subr.mxu0 0.0
        %861 = vmatpush1.msra.mxu0 0.0
        %862 = vmatprep.subr.mxu0 0.0
        %863 = vmatpush1.msra.mxu0 0.0
        %864 = vmatprep.subr.mxu0 0.0
        %865 = vmatpush1.msra.mxu0 0.0
        %866 = vmatprep.subr.mxu0 0.0
        %867 = vmatpush1.msra.mxu0 0.0
        %868 = vmatprep.subr.mxu0 0.0
        %869 = vmatpush1.msra.mxu0 0.0
        %870 = vmatprep.subr.mxu0 0.0
        %871 = vmatpush1.msra.mxu0 0.0
        %872 = vmatprep.subr.mxu0 0.0
        %873 = vmatpush1.msra.mxu0 0.0
        %874 = vmatprep.subr.mxu0 0.0
        %875 = vmatpush1.msra.mxu0 0.0
        %876 = vmatprep.subr.mxu0 0.0
        %877 = vmatpush1.msra.mxu0 0.0
        %878 = vmatprep.subr.mxu0 0.0
        %879 = vmatpush1.msra.mxu0 0.0
        %880 = vmatprep.subr.mxu0 0.0
        %881 = vmatpush1.msra.mxu0 0.0
        %882 = vmatprep.subr.mxu0 0.0
        %883 = vmatpush1.msra.mxu0 0.0
        %884 = vmatprep.subr.mxu0 0.0
        %885 = vmatpush1.msra.mxu0 0.0
        %886 = vmatprep.subr.mxu0 0.0
        %887 = vmatpush1.msra.mxu0 0.0
        %888 = vmatprep.subr.mxu0 0.0
        %889 = vmatpush1.msra.mxu0 0.0
        %890 = vmatprep.subr.mxu0 0.0
        %891 = vmatpush1.msra.mxu0 0.0
        %892 = vmatprep.subr.mxu0 0.0
        %893 = vmatpush1.msra.mxu0 0.0
        %894 = vmatprep.subr.mxu0 0.0
        %895 = vmatpush1.msra.mxu0 0.0
        %896 = vmatprep.subr.mxu0 0.0
        %897 = vmatpush1.msra.mxu0 0.0
        %898 = vmatprep.subr.mxu0 0.0
        %899 = vmatpush1.msra.mxu0 0.0
        %900 = vmatprep.subr.mxu0 0.0
        %901 = vmatpush1.msra.mxu0 0.0
        %902 = vmatprep.subr.mxu0 0.0
        %903 = vmatpush1.msra.mxu0 0.0
        %904 = vmatprep.subr.mxu0 0.0
        %905 = vmatpush1.msra.mxu0 0.0
        %906 = vmatprep.subr.mxu0 0.0
        %907 = vmatpush1.msra.mxu0 0.0
        %908 = vmatprep.mubr.f32.mxu0 0.0
        %909 = vmatmul.mubr.f32.gmra.mrb[0].mxu0 %v797
        %v910 = vpop.f32.mrb[0].mxu0
        %v911 = vadd.f32 %v789, %v910
        %v912 = vpop.f32.mrb[0].mxu0
        %v913 = vadd.f32 %v793, %v912
        %914 = vmatprep.mubr.f32.mxu0 0.0
        %915 = vmatmul.mubr.f32.gmra.mrb[0].mxu0 %v800
        %v916 = vpop.f32.mrb[0].mxu0
        %v917 = vadd.f32 %v789, %v916
        %v918 = vpop.f32.mrb[0].mxu0
        %v919 = vadd.f32 %v793, %v918
        %920 = vmatprep.mubr.f32.mxu0 0.0
        %921 = vmatmul.mubr.f32.gmra.mrb[0].mxu0 %v803
        %v922 = vpop.f32.mrb[0].mxu0
        %v923 = vadd.f32 %v789, %v922
        %v924 = vpop.f32.mrb[0].mxu0
        %v925 = vadd.f32 %v793, %v924
        %926 = vmatprep.mubr.f32.mxu0 0.0
        %927 = vmatmul.mubr.f32.gmra.mrb[0].mxu0 %v806
        %v928 = vpop.f32.mrb[0].mxu0
        %v929 = vadd.f32 %v789, %v928
        %v930 = vpop.f32.mrb[0].mxu0
        %v931 = vadd.f32 %v793, %v930
        %932 = vmatprep.mubr.f32.mxu0 0.0
        %933 = vmatmul.mubr.f32.gmra.mrb[0].mxu0 %v809
        %v934 = vpop.f32.mrb[0].mxu0
        %v935 = vadd.f32 %v789, %v934
        %v936 = vpop.f32.mrb[0].mxu0
        %v937 = vadd.f32 %v793, %v936
        %938 = vmatprep.mubr.f32.mxu0 0.0
        %939 = vmatmul.mubr.f32.gmra.mrb[0].mxu0 %v812
        %v940 = vpop.f32.mrb[0].mxu0
        %v941 = vadd.f32 %v789, %v940
        %v942 = vpop.f32.mrb[0].mxu0
        %v943 = vadd.f32 %v793, %v942
        %944 = vmatprep.mubr.f32.mxu0 0.0
        %945 = vmatmul.mubr.f32.gmra.mrb[0].mxu0 %v815
        %v946 = vpop.f32.mrb[0].mxu0
        %v947 = vadd.f32 %v789, %v946
        %v948 = vpop.f32.mrb[0].mxu0
        %v949 = vadd.f32 %v793, %v948
        %950 = vmatprep.mubr.f32.mxu0 0.0
        %951 = vmatmul.mubr.f32.gmra.mrb[0].mxu0 %v818
        %v952 = vpop.f32.mrb[0].mxu0
        %v953 = vadd.f32 %v789, %v952
        %v954 = vpop.f32.mrb[0].mxu0
        %v955 = vadd.f32 %v793, %v954
        %956 = vmatprep.mubr.f32.mxu0 0.0
        %957 = vmatmul.mubr.f32.gmra.mrb[0].mxu0 %v821
        %v958 = vpop.f32.mrb[0].mxu0
        %v959 = vadd.f32 %v789, %v958
        %v960 = vpop.f32.mrb[0].mxu0
        %v961 = vadd.f32 %v793, %v960
        %962 = vmatprep.mubr.f32.mxu0 0.0
        %963 = vmatmul.mubr.f32.gmra.mrb[0].mxu0 %v824
        %v964 = vpop.f32.mrb[0].mxu0
        %v965 = vadd.f32 %v789, %v964
        %v966 = vpop.f32.mrb[0].mxu0
        %v967 = vadd.f32 %v793, %v966
        %968 = vmatprep.mubr.f32.mxu0 0.0
        %969 = vmatmul.mubr.f32.gmra.mrb[0].mxu0 %v827
        %v970 = vpop.f32.mrb[0].mxu0
        %v971 = vadd.f32 %v789, %v970
        %v972 = vpop.f32.mrb[0].mxu0
        %v973 = vadd.f32 %v793, %v972
        %974 = vmatprep.mubr.f32.mxu0 0.0
        %975 = vmatmul.mubr.f32.gmra.mrb[0].mxu0 %v830
        %v976 = vpop.f32.mrb[0].mxu0
        %v977 = vadd.f32 %v789, %v976
        %v978 = vpop.f32.mrb[0].mxu0
        %v979 = vadd.f32 %v793, %v978
        %980 = vmatprep.mubr.f32.mxu0 0.0
        %981 = vmatmul.mubr.f32.gmra.mrb[0].mxu0 %v833
        %v982 = vpop.f32.mrb[0].mxu0
        %v983 = vadd.f32 %v789, %v982
        %v984 = vpop.f32.mrb[0].mxu0
        %v985 = vadd.f32 %v793, %v984
        %986 = vmatprep.mubr.f32.mxu0 0.0
        %987 = vmatmul.mubr.f32.gmra.mrb[0].mxu0 %v836
        %v988 = vpop.f32.mrb[0].mxu0
        %v989 = vadd.f32 %v789, %v988
        %v990 = vpop.f32.mrb[0].mxu0
        %v991 = vadd.f32 %v793, %v990
        %992 = vmatprep.mubr.f32.mxu0 0.0
        %993 = vmatmul.mubr.f32.gmra.mrb[0].mxu0 %v839
        %v994 = vpop.f32.mrb[0].mxu0
        %v995 = vadd.f32 %v789, %v994
        %v996 = vpop.f32.mrb[0].mxu0
        %v997 = vadd.f32 %v793, %v996
        %998 = vmatprep.mubr.f32.mxu0 0.0
        %999 = vmatmul.mubr.f32.gmra.mrb[0].mxu0 %v842
        %v1000 = vpop.f32.mrb[0].mxu0
        %v1001 = vadd.f32 %v789, %v1000
        %v1002 = vpop.f32.mrb[0].mxu0
        %v1003 = vadd.f32 %v793, %v1002
        %1004 = vdwg.mxu0
        %v1005 = vmul.f32 %v911, %v911
        %v1006 = vmul.f32 %v917, %v917
        %v1007 = vmul.f32 %v923, %v923
        %v1008 = vmul.f32 %v929, %v929
        %v1009 = vmul.f32 %v935, %v935
        %v1010 = vmul.f32 %v941, %v941
        %v1011 = vmul.f32 %v947, %v947
        %v1012 = vmul.f32 %v953, %v953
        %v1013 = vmul.f32 %v959, %v959
        %v1014 = vmul.f32 %v965, %v965
        %v1015 = vmul.f32 %v971, %v971
        %v1016 = vmul.f32 %v977, %v977
        %v1017 = vmul.f32 %v983, %v983
        %v1018 = vmul.f32 %v989, %v989
        %v1019 = vmul.f32 %v995, %v995
        %v1020 = vmul.f32 %v1001, %v1001
        %1021 = vadd.xlane.f32.xlu0 %v1005
        %v1022 = vpop.xlane.xlu0 %1021
        %1023 = vadd.xlane.f32.xlu0 %v1006
        %v1024 = vpop.xlane.xlu0 %1023
        %1025 = vadd.xlane.f32.xlu0 %v1007
        %v1026 = vpop.xlane.xlu0 %1025
        %1027 = vadd.xlane.f32.xlu0 %v1008
        %v1028 = vpop.xlane.xlu0 %1027
        %1029 = vadd.xlane.f32.xlu0 %v1009
        %v1030 = vpop.xlane.xlu0 %1029
        %1031 = vadd.xlane.f32.xlu0 %v1010
        %v1032 = vpop.xlane.xlu0 %1031
        %1033 = vadd.xlane.f32.xlu0 %v1011
        %v1034 = vpop.xlane.xlu0 %1033
        %1035 = vadd.xlane.f32.xlu0 %v1012
        %v1036 = vpop.xlane.xlu0 %1035
        %1037 = vadd.xlane.f32.xlu0 %v1013
        %v1038 = vpop.xlane.xlu0 %1037
        %1039 = vadd.xlane.f32.xlu0 %v1014
        %v1040 = vpop.xlane.xlu0 %1039
        %1041 = vadd.xlane.f32.xlu0 %v1015
        %v1042 = vpop.xlane.xlu0 %1041
        %1043 = vadd.xlane.f32.xlu0 %v1016
        %v1044 = vpop.xlane.xlu0 %1043
        %1045 = vadd.xlane.f32.xlu0 %v1017
        %v1046 = vpop.xlane.xlu0 %1045
        %1047 = vadd.xlane.f32.xlu0 %v1018
        %v1048 = vpop.xlane.xlu0 %1047
        %1049 = vadd.xlane.f32.xlu0 %v1019
        %v1050 = vpop.xlane.xlu0 %1049
        %1051 = vadd.xlane.f32.xlu0 %v1020
        %v1052 = vpop.xlane.xlu0 %1051
        %v1053 = vrsqrt.pop %v1022
        %v1054 = vmul.f32 %v1022, %v1053
        %vm1055 = vcmp.eq.f32.partialorder %v1022, inf
        %v1056 = vsel %vm1055, %v1022, %v1054
        %vm1057 = vcmp.eq.f32.partialorder %v1022, 0.0
        %v1058 = vand.u32 %v1022, 2147483648
        %v1059 = vsel %vm1057, %v1058, %v1056
        %v1060 = vrsqrt.pop %v1024
        %v1061 = vmul.f32 %v1024, %v1060
        %vm1062 = vcmp.eq.f32.partialorder %v1024, inf
        %v1063 = vsel %vm1062, %v1024, %v1061
        %vm1064 = vcmp.eq.f32.partialorder %v1024, 0.0
        %v1065 = vand.u32 %v1024, 2147483648
        %v1066 = vsel %vm1064, %v1065, %v1063
        %v1067 = vrsqrt.pop %v1026
        %v1068 = vmul.f32 %v1026, %v1067
        %vm1069 = vcmp.eq.f32.partialorder %v1026, inf
        %v1070 = vsel %vm1069, %v1026, %v1068
        %vm1071 = vcmp.eq.f32.partialorder %v1026, 0.0
        %v1072 = vand.u32 %v1026, 2147483648
        %v1073 = vsel %vm1071, %v1072, %v1070
        %v1074 = vrsqrt.pop %v1028
        %v1075 = vmul.f32 %v1028, %v1074
        %vm1076 = vcmp.eq.f32.partialorder %v1028, inf
        %v1077 = vsel %vm1076, %v1028, %v1075
        %vm1078 = vcmp.eq.f32.partialorder %v1028, 0.0
        %v1079 = vand.u32 %v1028, 2147483648
        %v1080 = vsel %vm1078, %v1079, %v1077
        %v1081 = vrsqrt.pop %v1030
        %v1082 = vmul.f32 %v1030, %v1081
        %vm1083 = vcmp.eq.f32.partialorder %v1030, inf
        %v1084 = vsel %vm1083, %v1030, %v1082
        %vm1085 = vcmp.eq.f32.partialorder %v1030, 0.0
        %v1086 = vand.u32 %v1030, 2147483648
        %v1087 = vsel %vm1085, %v1086, %v1084
        %v1088 = vrsqrt.pop %v1032
        %v1089 = vmul.f32 %v1032, %v1088
        %vm1090 = vcmp.eq.f32.partialorder %v1032, inf
        %v1091 = vsel %vm1090, %v1032, %v1089
        %vm1092 = vcmp.eq.f32.partialorder %v1032, 0.0
        %v1093 = vand.u32 %v1032, 2147483648
        %v1094 = vsel %vm1092, %v1093, %v1091
        %v1095 = vrsqrt.pop %v1034
        %v1096 = vmul.f32 %v1034, %v1095
        %vm1097 = vcmp.eq.f32.partialorder %v1034, inf
        %v1098 = vsel %vm1097, %v1034, %v1096
        %vm1099 = vcmp.eq.f32.partialorder %v1034, 0.0
        %v1100 = vand.u32 %v1034, 2147483648
        %v1101 = vsel %vm1099, %v1100, %v1098
        %v1102 = vrsqrt.pop %v1036
        %v1103 = vmul.f32 %v1036, %v1102
        %vm1104 = vcmp.eq.f32.partialorder %v1036, inf
        %v1105 = vsel %vm1104, %v1036, %v1103
        %vm1106 = vcmp.eq.f32.partialorder %v1036, 0.0
        %v1107 = vand.u32 %v1036, 2147483648
        %v1108 = vsel %vm1106, %v1107, %v1105
        %v1109 = vrsqrt.pop %v1038
        %v1110 = vmul.f32 %v1038, %v1109
        %vm1111 = vcmp.eq.f32.partialorder %v1038, inf
        %v1112 = vsel %vm1111, %v1038, %v1110
        %vm1113 = vcmp.eq.f32.partialorder %v1038, 0.0
        %v1114 = vand.u32 %v1038, 2147483648
        %v1115 = vsel %vm1113, %v1114, %v1112
        %v1116 = vrsqrt.pop %v1040
        %v1117 = vmul.f32 %v1040, %v1116
        %vm1118 = vcmp.eq.f32.partialorder %v1040, inf
        %v1119 = vsel %vm1118, %v1040, %v1117
        %vm1120 = vcmp.eq.f32.partialorder %v1040, 0.0
        %v1121 = vand.u32 %v1040, 2147483648
        %v1122 = vsel %vm1120, %v1121, %v1119
        %v1123 = vrsqrt.pop %v1042
        %v1124 = vmul.f32 %v1042, %v1123
        %vm1125 = vcmp.eq.f32.partialorder %v1042, inf
        %v1126 = vsel %vm1125, %v1042, %v1124
        %vm1127 = vcmp.eq.f32.partialorder %v1042, 0.0
        %v1128 = vand.u32 %v1042, 2147483648
        %v1129 = vsel %vm1127, %v1128, %v1126
        %v1130 = vrsqrt.pop %v1044
        %v1131 = vmul.f32 %v1044, %v1130
        %vm1132 = vcmp.eq.f32.partialorder %v1044, inf
        %v1133 = vsel %vm1132, %v1044, %v1131
        %vm1134 = vcmp.eq.f32.partialorder %v1044, 0.0
        %v1135 = vand.u32 %v1044, 2147483648
        %v1136 = vsel %vm1134, %v1135, %v1133
        %v1137 = vrsqrt.pop %v1046
        %v1138 = vmul.f32 %v1046, %v1137
        %vm1139 = vcmp.eq.f32.partialorder %v1046, inf
        %v1140 = vsel %vm1139, %v1046, %v1138
        %vm1141 = vcmp.eq.f32.partialorder %v1046, 0.0
        %v1142 = vand.u32 %v1046, 2147483648
        %v1143 = vsel %vm1141, %v1142, %v1140
        %v1144 = vrsqrt.pop %v1048
        %v1145 = vmul.f32 %v1048, %v1144
        %vm1146 = vcmp.eq.f32.partialorder %v1048, inf
        %v1147 = vsel %vm1146, %v1048, %v1145
        %vm1148 = vcmp.eq.f32.partialorder %v1048, 0.0
        %v1149 = vand.u32 %v1048, 2147483648
        %v1150 = vsel %vm1148, %v1149, %v1147
        %v1151 = vrsqrt.pop %v1050
        %v1152 = vmul.f32 %v1050, %v1151
        %vm1153 = vcmp.eq.f32.partialorder %v1050, inf
        %v1154 = vsel %vm1153, %v1050, %v1152
        %vm1155 = vcmp.eq.f32.partialorder %v1050, 0.0
        %v1156 = vand.u32 %v1050, 2147483648
        %v1157 = vsel %vm1155, %v1156, %v1154
        %v1158 = vrsqrt.pop %v1052
        %v1159 = vmul.f32 %v1052, %v1158
        %vm1160 = vcmp.eq.f32.partialorder %v1052, inf
        %v1161 = vsel %vm1160, %v1052, %v1159
        %vm1162 = vcmp.eq.f32.partialorder %v1052, 0.0
        %v1163 = vand.u32 %v1052, 2147483648
        %v1164 = vsel %vm1162, %v1163, %v1161
        %v1165 = vmax.f32 %v1059, 1e-08
        %v1166 = vmax.f32 %v1066, 1e-08
        %v1167 = vmax.f32 %v1073, 1e-08
        %v1168 = vmax.f32 %v1080, 1e-08
        %v1169 = vmax.f32 %v1087, 1e-08
        %v1170 = vmax.f32 %v1094, 1e-08
        %v1171 = vmax.f32 %v1101, 1e-08
        %v1172 = vmax.f32 %v1108, 1e-08
        %v1173 = vmax.f32 %v1115, 1e-08
        %v1174 = vmax.f32 %v1122, 1e-08
        %v1175 = vmax.f32 %v1129, 1e-08
        %v1176 = vmax.f32 %v1136, 1e-08
        %v1177 = vmax.f32 %v1143, 1e-08
        %v1178 = vmax.f32 %v1150, 1e-08
        %v1179 = vmax.f32 %v1157, 1e-08
        %v1180 = vmax.f32 %v1164, 1e-08
        %v1181 = vrcp.pop %v1165
        %v1182 = vrcp.pop %v1166
        %v1183 = vrcp.pop %v1167
        %v1184 = vrcp.pop %v1168
        %v1185 = vrcp.pop %v1169
        %v1186 = vrcp.pop %v1170
        %v1187 = vrcp.pop %v1171
        %v1188 = vrcp.pop %v1172
        %v1189 = vrcp.pop %v1173
        %v1190 = vrcp.pop %v1174
        %v1191 = vrcp.pop %v1175
        %v1192 = vrcp.pop %v1176
        %v1193 = vrcp.pop %v1177
        %v1194 = vrcp.pop %v1178
        %v1195 = vrcp.pop %v1179
        %v1196 = vrcp.pop %v1180
        %v1197 = vmul.f32 %v911, %v1181
        %v1198 = vmul.f32 %v917, %v1182
        %v1199 = vmul.f32 %v923, %v1183
        %v1200 = vmul.f32 %v929, %v1184
        %v1201 = vmul.f32 %v935, %v1185
        %v1202 = vmul.f32 %v941, %v1186
        %v1203 = vmul.f32 %v947, %v1187
        %v1204 = vmul.f32 %v953, %v1188
        %v1205 = vmul.f32 %v959, %v1189
        %v1206 = vmul.f32 %v965, %v1190
        %v1207 = vmul.f32 %v971, %v1191
        %v1208 = vmul.f32 %v977, %v1192
        %v1209 = vmul.f32 %v983, %v1193
        %v1210 = vmul.f32 %v989, %v1194
        %v1211 = vmul.f32 %v995, %v1195
        %v1212 = vmul.f32 %v1001, %v1196
        %1213 = vst [vmem:[%s303] sm:$0xff] %v1197
        %1214 = vst [vmem:[%s303 + $0x8] sm:$0xff] %v1198
        %1215 = vst [vmem:[%s303 + $0x10] sm:$0xff] %v1199
        %1216 = vst [vmem:[%s303 + $0x18] sm:$0xff] %v1200
        %1217 = vst [vmem:[%s303 + $0x20] sm:$0xff] %v1201
        %1218 = vst [vmem:[%s303 + $0x28] sm:$0xff] %v1202
        %1219 = vst [vmem:[%s303 + $0x30] sm:$0xff] %v1203
        %1220 = vst [vmem:[%s303 + $0x38] sm:$0xff] %v1204
        %1221 = vst [vmem:[%s303 + $0x40] sm:$0xff] %v1205
        %1222 = vst [vmem:[%s303 + $0x48] sm:$0xff] %v1206
        %1223 = vst [vmem:[%s303 + $0x50] sm:$0xff] %v1207
        %1224 = vst [vmem:[%s303 + $0x58] sm:$0xff] %v1208
        %1225 = vst [vmem:[%s303 + $0x60] sm:$0xff] %v1209
        %1226 = vst [vmem:[%s303 + $0x68] sm:$0xff] %v1210
        %1227 = vst [vmem:[%s303 + $0x70] sm:$0xff] %v1211
        %1228 = vst [vmem:[%s303 + $0x78] sm:$0xff] %v1212
        %vm1229 = vcmp.lt.f32.partialorder %v913, 0.0
        %vm1230 = vcmp.lt.f32.partialorder %v919, 0.0
        %vm1231 = vcmp.lt.f32.partialorder %v925, 0.0
        %vm1232 = vcmp.lt.f32.partialorder %v931, 0.0
        %vm1233 = vcmp.lt.f32.partialorder %v937, 0.0
        %vm1234 = vcmp.lt.f32.partialorder %v943, 0.0
        %vm1235 = vcmp.lt.f32.partialorder %v949, 0.0
        %vm1236 = vcmp.lt.f32.partialorder %v955, 0.0
        %vm1237 = vcmp.lt.f32.partialorder %v961, 0.0
        %vm1238 = vcmp.lt.f32.partialorder %v967, 0.0
        %vm1239 = vcmp.lt.f32.partialorder %v973, 0.0
        %vm1240 = vcmp.lt.f32.partialorder %v979, 0.0
        %vm1241 = vcmp.lt.f32.partialorder %v985, 0.0
        %vm1242 = vcmp.lt.f32.partialorder %v991, 0.0
        %vm1243 = vcmp.lt.f32.partialorder %v997, 0.0
        %vm1244 = vcmp.lt.f32.partialorder %v1003, 0.0
        %v1245 = vmul.f32 %v913, 1.442695
        %v1246 = vpow.pop %v1245
        %v1247 = vmul.f32 %v919, 1.442695
        %v1248 = vpow.pop %v1247
        %v1249 = vmul.f32 %v925, 1.442695
        %v1250 = vpow.pop %v1249
        %v1251 = vmul.f32 %v931, 1.442695
        %v1252 = vpow.pop %v1251
        %v1253 = vmul.f32 %v937, 1.442695
        %v1254 = vpow.pop %v1253
        %v1255 = vmul.f32 %v943, 1.442695
        %v1256 = vpow.pop %v1255
        %v1257 = vmul.f32 %v949, 1.442695
        %v1258 = vpow.pop %v1257
        %v1259 = vmul.f32 %v955, 1.442695
        %v1260 = vpow.pop %v1259
        %v1261 = vmul.f32 %v961, 1.442695
        %v1262 = vpow.pop %v1261
        %v1263 = vmul.f32 %v967, 1.442695
        %v1264 = vpow.pop %v1263
        %v1265 = vmul.f32 %v973, 1.442695
        %v1266 = vpow.pop %v1265
        %v1267 = vmul.f32 %v979, 1.442695
        %v1268 = vpow.pop %v1267
        %v1269 = vmul.f32 %v985, 1.442695
        %v1270 = vpow.pop %v1269
        %v1271 = vmul.f32 %v991, 1.442695
        %v1272 = vpow.pop %v1271
        %v1273 = vmul.f32 %v997, 1.442695
        %v1274 = vpow.pop %v1273
        %v1275 = vmul.f32 %v1003, 1.442695
        %v1276 = vpow.pop %v1275
        %v1277 = vadd.f32 %v913, 1.0
        %v1278 = vadd.f32 %v919, 1.0
        %v1279 = vadd.f32 %v925, 1.0
        %v1280 = vadd.f32 %v931, 1.0
        %v1281 = vadd.f32 %v937, 1.0
        %v1282 = vadd.f32 %v943, 1.0
        %v1283 = vadd.f32 %v949, 1.0
        %v1284 = vadd.f32 %v955, 1.0
        %v1285 = vadd.f32 %v961, 1.0
        %v1286 = vadd.f32 %v967, 1.0
        %v1287 = vadd.f32 %v973, 1.0
        %v1288 = vadd.f32 %v979, 1.0
        %v1289 = vadd.f32 %v985, 1.0
        %v1290 = vadd.f32 %v991, 1.0
        %v1291 = vadd.f32 %v997, 1.0
        %v1292 = vadd.f32 %v1003, 1.0
        %v1293 = vsel %vm1229, %v1246, %v1277
        %v1294 = vsel %vm1230, %v1248, %v1278
        %v1295 = vsel %vm1231, %v1250, %v1279
        %v1296 = vsel %vm1232, %v1252, %v1280
        %v1297 = vsel %vm1233, %v1254, %v1281
        %v1298 = vsel %vm1234, %v1256, %v1282
        %v1299 = vsel %vm1235, %v1258, %v1283
        %v1300 = vsel %vm1236, %v1260, %v1284
        %v1301 = vsel %vm1237, %v1262, %v1285
        %v1302 = vsel %vm1238, %v1264, %v1286
        %v1303 = vsel %vm1239, %v1266, %v1287
        %v1304 = vsel %vm1240, %v1268, %v1288
        %v1305 = vsel %vm1241, %v1270, %v1289
        %v1306 = vsel %vm1242, %v1272, %v1290
        %v1307 = vsel %vm1243, %v1274, %v1291
        %v1308 = vsel %vm1244, %v1276, %v1292
        %1309 = vst [vmem:[%s310] sm:$0xff] %v1293
        %1310 = vst [vmem:[%s310 + $0x8] sm:$0xff] %v1294
        %1311 = vst [vmem:[%s310 + $0x10] sm:$0xff] %v1295
        %1312 = vst [vmem:[%s310 + $0x18] sm:$0xff] %v1296
        %1313 = vst [vmem:[%s310 + $0x20] sm:$0xff] %v1297
        %1314 = vst [vmem:[%s310 + $0x28] sm:$0xff] %v1298
        %1315 = vst [vmem:[%s310 + $0x30] sm:$0xff] %v1299
        %1316 = vst [vmem:[%s310 + $0x38] sm:$0xff] %v1300
        %1317 = vst [vmem:[%s310 + $0x40] sm:$0xff] %v1301
        %1318 = vst [vmem:[%s310 + $0x48] sm:$0xff] %v1302
        %1319 = vst [vmem:[%s310 + $0x50] sm:$0xff] %v1303
        %1320 = vst [vmem:[%s310 + $0x58] sm:$0xff] %v1304
        %1321 = vst [vmem:[%s310 + $0x60] sm:$0xff] %v1305
        %1322 = vst [vmem:[%s310 + $0x68] sm:$0xff] %v1306
        %1323 = vst [vmem:[%s310 + $0x70] sm:$0xff] %v1307
        %1324 = vst [vmem:[%s310 + $0x78] sm:$0xff] %v1308
        %s1325 = sand.u32 %s186, 1
        %s1326 = scalar_lea.sflag [#allocation3], %s1325
        %s1327 = sand.u32 %s186, 1
        %s1328 = smul.addr %s1327, 128
        %s1329 = scalar_lea.vmem [#allocation2], %s1328
        %s1330 = sand.u32 %s212, 1
        %s1331 = scalar_lea.sflag [#allocation5], %s1330
        %s1332 = sand.u32 %s212, 1
        %s1333 = smul.addr %s1332, 128
        %s1334 = scalar_lea.vmem [#allocation4], %s1333
        // Predicated region
        $region49: #{tpu_custom_call.1} parent=47 // pred_check
          %p1335 = pneg %p196
        $region50: #{tpu_custom_call.1} parent=47 // pred_check_branch
          %1337 = sbr.rel (%p1335) target = $region52
        $region51: #{tpu_custom_call.1} parent=47 // pred_region
          %s1338 = smul.u32 16, %s26
          %s1340 = ssub.s32 2048, 2048
          %1341 = vsyncadd %s1326, %s1340
          %s1342 = smul.addr %s1338, 128
          %s1343 = scalar_lea.hbm %s7, %s1342
          %s1344 = sshll.u32 %s1329, 4
          %s1345 = int_to_ptr.vmem [resolvable:$true] %s1344
          %1350 = dma.vmem_to_hbm [thread:$0]  %s1345, 2048, %s1343, %s1326, 128, 128, 8
        $region52: #{tpu_custom_call.1} parent=47 // pred_fallthru
          _
        // Predicated region
        $region53: #{tpu_custom_call.1} parent=47 // pred_check
          %p1351 = pneg %p222
        $region54: #{tpu_custom_call.1} parent=47 // pred_check_branch
          %1353 = sbr.rel (%p1351) target = $region56
        $region55: #{tpu_custom_call.1} parent=47 // pred_region
          %s1354 = smul.u32 16, %s26
          %s1356 = ssub.s32 2048, 2048
          %1357 = vsyncadd %s1331, %s1356
          %s1358 = smul.addr %s1354, 128
          %s1359 = scalar_lea.hbm %s8, %s1358
          %s1360 = sshll.u32 %s1334, 4
          %s1361 = int_to_ptr.vmem [resolvable:$true] %s1360
          %1366 = dma.vmem_to_hbm [thread:$0]  %s1361, 2048, %s1359, %s1331, 128, 128, 8
        $region56: #{tpu_custom_call.1} parent=47 // pred_fallthru
          _
      $region48: #{tpu_custom_call.1} parent=5 // pred_fallthru
        _
      %p1367 = scmp.le.s32.totalorder 2, %s21
      // Predicated region
      $region57: #{tpu_custom_call.1} parent=5 // pred_check
        %p1368 = pneg %p1367
      $region58: #{tpu_custom_call.1} parent=5 // pred_check_branch
        %1370 = sbr.rel (%p1368) target = $region60
      $region59: #{tpu_custom_call.1} parent=5 // pred_region
        %s1371 = ssub.s32 %s21, 2
        // Predicated region
        $region61: #{tpu_custom_call.1} parent=59 // pred_check
          %p1372 = pneg %p202
        $region62: #{tpu_custom_call.1} parent=59 // pred_check_branch
          %1374 = sbr.rel (%p1372) target = $region64
        $region63: #{tpu_custom_call.1} parent=59 // pred_region
          %s1375 = sand.u32 %s187, 1
          %s1376 = scalar_lea.sflag [#allocation3], %s1375
          %s1377 = sand.u32 %s187, 1
          %s1378 = smul.addr %s1377, 128
          %s1379 = scalar_lea.vmem [#allocation2], %s1378
          %1380 = dma.done %s1376, 2048
        $region64: #{tpu_custom_call.1} parent=59 // pred_fallthru
          _
        // Predicated region
        $region65: #{tpu_custom_call.1} parent=59 // pred_check
          %p1381 = pneg %p228
        $region66: #{tpu_custom_call.1} parent=59 // pred_check_branch
          %1383 = sbr.rel (%p1381) target = $region68
        $region67: #{tpu_custom_call.1} parent=59 // pred_region
          %s1384 = sand.u32 %s213, 1
          %s1385 = scalar_lea.sflag [#allocation5], %s1384
          %s1386 = sand.u32 %s213, 1
          %s1387 = smul.addr %s1386, 128
          %s1388 = scalar_lea.vmem [#allocation4], %s1387
          %1389 = dma.done %s1385, 2048
        $region68: #{tpu_custom_call.1} parent=59 // pred_fallthru
          _
      $region60: #{tpu_custom_call.1} parent=5 // pred_fallthru
        _
    $region6: #{tpu_custom_call.1} parent=1 // loop_footer
      %s25 = sadd.s32 1, %s21
    $region7: #{tpu_custom_call.1} parent=1 // loop_footer_branch
      %20 = sbr.rel target = $region3
    $region8: #{tpu_custom_call.1} parent=1 // loop_exit
      _
    %1390 = vsyncpa [#allocation3], 1
    %s1391 = scalar_lea.sflag [#allocation3], 1
    %1392 = vsyncpa %s1391, 1
    %1393 = vsyncpa [#allocation5], 1
    %s1394 = scalar_lea.sflag [#allocation5], 1
    %1395 = vsyncpa %s1394, 1

</llo_original>
